<compile_context>
chip_gen: v5e
topology: v5e:2x2
jax: 0.10.0
libtpu: 0.0.40
codegen_flags: <defaults>
</compile_context>

<pallas_src>
import jax
import jax.numpy as jnp
from jax import lax
from jax.experimental import pallas as pl
from jax.experimental.pallas import tpu as pltpu


_FULL_UNROLL_T = 32  # fully unroll the time loop in-kernel up to this length


def _round_up(x, m):
    return ((x + m - 1) // m) * m


def make_kernel(num_layers, T, Bp):
    n_in = 2 + 3 * num_layers + 2  # x, h0, (wih, whh, b) * L, wfc, bfc

    def kernel(*refs):
        x_ref, h0_ref = refs[0], refs[1]
        wfc_ref = refs[2 + 3 * num_layers]
        bfc_ref = refs[3 + 3 * num_layers]
        logits_ref = refs[n_in]          # (T*Bp, Vp)
        hid_ref = refs[n_in + 1]         # (L, Bp, Hp)
        xp_ref = refs[n_in + 2]          # (T*Bp, Hp) scratch: batched input projection
        hs_ref = refs[n_in + 3]          # (T*Bp, Hp) scratch: layer output sequence

        for l in range(num_layers):
            wih = refs[2 + 3 * l][...]   # (in_dim_p, Hp)  (pre-transposed)
            whh = refs[3 + 3 * l][...]   # (Hp, Hp)        (pre-transposed)
            b = refs[4 + 3 * l][...]     # (1, Hp)         (b_ih + b_hh)

            # Hoisted, MXU-shaped input projection over the whole sequence.
            src = x_ref[...] if l == 0 else hs_ref[...]
            xp_ref[...] = jnp.dot(src, wih,
                                  preferred_element_type=jnp.float32) + b

            # Serial recurrence: only h @ Whh + add + tanh per step.
            def step_at(start, h, whh=whh):
                h_new = jnp.tanh(
                    xp_ref[pl.ds(start, Bp), :]
                    + jnp.dot(h, whh, preferred_element_type=jnp.float32)
                )
                hs_ref[pl.ds(start, Bp), :] = h_new
                return h_new

            if T <= _FULL_UNROLL_T:
                h_last = h0_ref[l]
                for t in range(T):           # static -> fully unrolled
                    h_last = step_at(t * Bp, h_last)
            else:
                def body(t, h, step_at=step_at):
                    return step_at(pl.multiple_of(t * Bp, Bp), h)
                h_last = lax.fori_loop(0, T, body, h0_ref[l])

            hid_ref[l] = h_last              # one store per layer (not per step)

        # Hoisted final FC: one (T*Bp, Hp) x (Hp, Vp) matmul, lane-dense output.
        logits_ref[...] = (
            jnp.dot(hs_ref[...], wfc_ref[...], preferred_element_type=jnp.float32)
            + bfc_ref[...]
        )

    return kernel


def char_rnn_forward(tokens, hidden, params):
    """tokens: (B, T) int32, hidden: (L, B, H) f32 -> (logits (B*T, V), hidden (L, B, H))"""
    B, T = tokens.shape
    L, _, H = hidden.shape
    E = params["embed"].shape[1]
    V = params["wfc"].shape[1]

    Bp = _round_up(B, 8)       # sublane-dense batch
    Ep = _round_up(E, 128)     # lane-dense feature dims
    Hp = _round_up(H, 128)
    Vp = _round_up(V, 128)

    # Embedding lookup (gather) -- glue in plain JAX.
    emb = params["embed"][tokens]                          # (B, T, E)
    x_tm = jnp.transpose(emb, (1, 0, 2))                   # (T, B, E) time-major
    x_tm = jnp.pad(x_tm, ((0, 0), (0, Bp - B), (0, Ep - E)))
    x_flat = x_tm.reshape(T * Bp, Ep)

    h0 = jnp.pad(hidden, ((0, 0), (0, Bp - B), (0, Hp - H)))

    args = [x_flat, h0]
    in_specs = [
        pl.BlockSpec((T * Bp, Ep), lambda i: (0, 0)),
        pl.BlockSpec((L, Bp, Hp), lambda i: (0, 0, 0)),
    ]
    for l in range(L):
        in_dim = E if l == 0 else H
        in_dim_p = Ep if l == 0 else Hp
        wih = jnp.pad(params["wih"][l], ((0, in_dim_p - in_dim), (0, Hp - H)))
        whh = jnp.pad(params["whh"][l], ((0, Hp - H), (0, Hp - H)))
        b = jnp.pad(params["b"][l], ((0, 0), (0, Hp - H)))
        args += [wih, whh, b]
        in_specs += [
            pl.BlockSpec((in_dim_p, Hp), lambda i: (0, 0)),
            pl.BlockSpec((Hp, Hp), lambda i: (0, 0)),
            pl.BlockSpec((1, Hp), lambda i: (0, 0)),
        ]
    wfc = jnp.pad(params["wfc"], ((0, Hp - H), (0, Vp - V)))
    bfc = jnp.pad(params["bfc"], ((0, 0), (0, Vp - V)))
    args += [wfc, bfc]
    in_specs += [
        pl.BlockSpec((Hp, Vp), lambda i: (0, 0)),
        pl.BlockSpec((1, Vp), lambda i: (0, 0)),
    ]

    out_specs = [
        pl.BlockSpec((T * Bp, Vp), lambda i: (0, 0)),
        pl.BlockSpec((L, Bp, Hp), lambda i: (0, 0, 0)),
    ]
    out_shape = (
        jax.ShapeDtypeStruct((T * Bp, Vp), jnp.float32),
        jax.ShapeDtypeStruct((L, Bp, Hp), jnp.float32),
    )

    logits_p, hid_p = pl.pallas_call(
        make_kernel(L, T, Bp),
        out_shape=out_shape,
        grid_spec=pltpu.PrefetchScalarGridSpec(
            num_scalar_prefetch=0,
            grid=(1,),                                    # single invocation
            in_specs=in_specs,
            out_specs=out_specs,
            scratch_shapes=[
                pltpu.VMEM((T * Bp, Hp), jnp.float32),    # xp: batched input proj
                pltpu.VMEM((T * Bp, Hp), jnp.float32),    # hs: hidden sequence
            ],
        ),
        compiler_params=pltpu.CompilerParams(
            dimension_semantics=("arbitrary",),           # recurrence is serial
        ),
    )(*args)

    # Un-pad and restore PyTorch's (B*T, V) row ordering.
    logits = logits_p.reshape(T, Bp, Vp)[:, :B, :V]
    logits = jnp.transpose(logits, (1, 0, 2)).reshape(B * T, V)
    h_final = hid_p[:, :B, :H]
    return logits, h_final


def ref_forward(tokens, hidden, params):
    """Pure-JAX reference matching PyTorch nn.RNN(tanh, batch_first=True)."""
    L, _, H = hidden.shape
    x = params["embed"][tokens]                   # (B, T, E)
    inp = x
    finals = []
    for l in range(L):
        Wih, Whh, b = params["wih"][l], params["whh"][l], params["b"][l]

        def step(h, xt, Wih=Wih, Whh=Whh, b=b):
            hn = jnp.tanh(xt @ Wih + h @ Whh + b)
            return hn, hn

        h_last, outs = lax.scan(step, hidden[l], jnp.swapaxes(inp, 0, 1))
        inp = jnp.swapaxes(outs, 0, 1)
        finals.append(h_last)
    logits = inp.reshape(-1, H) @ params["wfc"] + params["bfc"][0]
    return logits, jnp.stack(finals)


def init_params(key, vocab_size, embed_size, hidden_size, num_layers):
    """Deterministic synthetic init (uniform +/- 1/sqrt(H), like PyTorch)."""
    ks = jax.random.split(key, 4 + 4 * num_layers)
    s = 1.0 / jnp.sqrt(hidden_size)
    params = {
        "embed": jax.random.normal(ks[0], (vocab_size, embed_size), jnp.float32),
        "wfc": jax.random.uniform(ks[1], (hidden_size, vocab_size),
                                  jnp.float32, -s, s),
        "bfc": jax.random.uniform(ks[2], (1, vocab_size), jnp.float32, -s, s),
        "wih": [],
        "whh": [],
        "b": [],
    }
    for l in range(num_layers):
        in_dim = embed_size if l == 0 else hidden_size
        k0, k1, k2, k3 = ks[3 + 4 * l: 7 + 4 * l]
        # stored pre-transposed: x @ wih, h @ whh
        params["wih"].append(
            jax.random.uniform(k0, (in_dim, hidden_size), jnp.float32, -s, s))
        params["whh"].append(
            jax.random.uniform(k1, (hidden_size, hidden_size), jnp.float32, -s, s))
        b_ih = jax.random.uniform(k2, (1, hidden_size), jnp.float32, -s, s)
        b_hh = jax.random.uniform(k3, (1, hidden_size), jnp.float32, -s, s)
        params["b"].append(b_ih + b_hh)
    return params


if __name__ == "__main__":
    vocab_size, embed_size, hidden_size, num_layers = 64, 32, 32, 2
    B, T = 2, 8

    key = jax.random.PRNGKey(0)
    k_tok, k_par = jax.random.split(key)
    tokens = jax.random.randint(k_tok, (B, T), 0, vocab_size, dtype=jnp.int32)
    hidden0 = jnp.zeros((num_layers, B, hidden_size), jnp.float32)  # init_hidden
    params = init_params(k_par, vocab_size, embed_size, hidden_size, num_layers)

    logits, h_final = char_rnn_forward(tokens, hidden0, params)
    logits, h_final = jax.block_until_ready((logits, h_final))

    ref_logits, ref_h = ref_forward(tokens, hidden0, params)
    assert logits.shape == (B * T, vocab_size)
    assert h_final.shape == (num_layers, B, hidden_size)
    assert jnp.allclose(logits, ref_logits, rtol=1e-5, atol=1e-5)
    assert jnp.allclose(h_final, ref_h, rtol=1e-5, atol=1e-5)

    print("KERNEL_OK")
</pallas_src>

<mosaic_0001>
module attributes {stable_mosaic.version = 11 : i64} {
  func.func @kernel(%arg0: i32, %arg1: memref<64x128xf32, #tpu.memory_space<vmem>>, %arg2: memref<2x8x128xf32, #tpu.memory_space<vmem>>, %arg3: memref<128x128xf32, #tpu.memory_space<vmem>>, %arg4: memref<128x128xf32, #tpu.memory_space<vmem>>, %arg5: memref<1x128xf32, #tpu.memory_space<vmem>>, %arg6: memref<128x128xf32, #tpu.memory_space<vmem>>, %arg7: memref<128x128xf32, #tpu.memory_space<vmem>>, %arg8: memref<1x128xf32, #tpu.memory_space<vmem>>, %arg9: memref<128x128xf32, #tpu.memory_space<vmem>>, %arg10: memref<1x128xf32, #tpu.memory_space<vmem>>, %arg11: memref<64x128xf32, #tpu.memory_space<vmem>>, %arg12: memref<2x8x128xf32, #tpu.memory_space<vmem>>, %arg13: memref<64x128xf32, #tpu.memory_space<vmem>>, %arg14: memref<64x128xf32, #tpu.memory_space<vmem>>) attributes {dimension_semantics = [#tpu.dimension_semantics<arbitrary>], iteration_bounds = array<i64: 1>, scalar_prefetch = 0 : i64, scratch_operands = 2 : i64, tpu.core_type = #tpu.core_type<tc>, window_params = [{pipeline_mode = #tpu.pipeline_mode<synchronous>, transform_indices = @transform_0, window_bounds = array<i64: 64, 128>}, {pipeline_mode = #tpu.pipeline_mode<synchronous>, transform_indices = @transform_1, window_bounds = array<i64: 2, 8, 128>}, {pipeline_mode = #tpu.pipeline_mode<synchronous>, transform_indices = @transform_2, window_bounds = array<i64: 128, 128>}, {pipeline_mode = #tpu.pipeline_mode<synchronous>, transform_indices = @transform_3, window_bounds = array<i64: 128, 128>}, {pipeline_mode = #tpu.pipeline_mode<synchronous>, transform_indices = @transform_4, window_bounds = array<i64: 1, 128>}, {pipeline_mode = #tpu.pipeline_mode<synchronous>, transform_indices = @transform_5, window_bounds = array<i64: 128, 128>}, {pipeline_mode = #tpu.pipeline_mode<synchronous>, transform_indices = @transform_6, window_bounds = array<i64: 128, 128>}, {pipeline_mode = #tpu.pipeline_mode<synchronous>, transform_indices = @transform_7, window_bounds = array<i64: 1, 128>}, {pipeline_mode = #tpu.pipeline_mode<synchronous>, transform_indices = @transform_8, window_bounds = array<i64: 128, 128>}, {pipeline_mode = #tpu.pipeline_mode<synchronous>, transform_indices = @transform_9, window_bounds = array<i64: 1, 128>}, {pipeline_mode = #tpu.pipeline_mode<synchronous>, transform_indices = @transform_10, window_bounds = array<i64: 64, 128>}, {pipeline_mode = #tpu.pipeline_mode<synchronous>, transform_indices = @transform_11, window_bounds = array<i64: 2, 8, 128>}]} {
    %c0 = arith.constant 0 : index
    %c0_0 = arith.constant 0 : index
    %0 = vector.load %arg3[%c0, %c0_0] : memref<128x128xf32, #tpu.memory_space<vmem>>, vector<128x128xf32>
    %c0_1 = arith.constant 0 : index
    %c0_2 = arith.constant 0 : index
    %1 = vector.load %arg4[%c0_1, %c0_2] : memref<128x128xf32, #tpu.memory_space<vmem>>, vector<128x128xf32>
    %c0_3 = arith.constant 0 : index
    %c0_4 = arith.constant 0 : index
    %2 = vector.load %arg5[%c0_3, %c0_4] : memref<1x128xf32, #tpu.memory_space<vmem>>, vector<1x128xf32>
    %c0_5 = arith.constant 0 : index
    %c0_6 = arith.constant 0 : index
    %3 = vector.load %arg1[%c0_5, %c0_6] : memref<64x128xf32, #tpu.memory_space<vmem>>, vector<64x128xf32>
    %cst = arith.constant dense<0.000000e+00> : vector<64x128xf32>
    %4 = tpu.matmul %3, %0, %cst {dimension_numbers = #tpu.dot_dimension_numbers<[1], [0], [0], [1], [0, 0, 1, 1], [], []>} : vector<64x128xf32>, vector<128x128xf32>, vector<64x128xf32> -> vector<64x128xf32>
    %5 = vector.broadcast %2 : vector<1x128xf32> to vector<64x128xf32>
    %6 = arith.addf %4, %5 : vector<64x128xf32>
    %c0_7 = arith.constant 0 : index
    %c0_8 = arith.constant 0 : index
    %7 = vector.load %arg13[%c0_7, %c0_8] : memref<64x128xf32, #tpu.memory_space<vmem>>, vector<64x128xf32>
    tpu.vector_store %arg13[%c0_7, %c0_8], %6 {strides = array<i32>} : memref<64x128xf32, #tpu.memory_space<vmem>>, vector<64x128xf32>,
    %c0_9 = arith.constant 0 : index
    %c0_10 = arith.constant 0 : index
    %c0_11 = arith.constant 0 : index
    %8 = vector.load %arg2[%c0_9, %c0_10, %c0_11] : memref<2x8x128xf32, #tpu.memory_space<vmem>>, vector<1x8x128xf32>
    %9 = vector.shape_cast %8 : vector<1x8x128xf32> to vector<8x128xf32>
    %c0_12 = arith.constant 0 : index
    %c0_13 = arith.constant 0 : index
    %10 = vector.load %arg13[%c0_12, %c0_13] : memref<64x128xf32, #tpu.memory_space<vmem>>, vector<8x128xf32>
    %cst_14 = arith.constant dense<0.000000e+00> : vector<8x128xf32>
    %11 = tpu.matmul %9, %1, %cst_14 {dimension_numbers = #tpu.dot_dimension_numbers<[1], [0], [0], [1], [0, 0, 1, 1], [], []>} : vector<8x128xf32>, vector<128x128xf32>, vector<8x128xf32> -> vector<8x128xf32>
    %12 = arith.addf %10, %11 : vector<8x128xf32>
    %13 = math.tanh %12 : vector<8x128xf32>
    %c0_15 = arith.constant 0 : index
    %c0_16 = arith.constant 0 : index
    %14 = vector.load %arg14[%c0_15, %c0_16] : memref<64x128xf32, #tpu.memory_space<vmem>>, vector<8x128xf32>
    tpu.vector_store %arg14[%c0_15, %c0_16], %13 {strides = array<i32>} : memref<64x128xf32, #tpu.memory_space<vmem>>, vector<8x128xf32>,
    %c8 = arith.constant 8 : index
    %c0_17 = arith.constant 0 : index
    %15 = vector.load %arg13[%c8, %c0_17] : memref<64x128xf32, #tpu.memory_space<vmem>>, vector<8x128xf32>
    %cst_18 = arith.constant dense<0.000000e+00> : vector<8x128xf32>
    %16 = tpu.matmul %13, %1, %cst_18 {dimension_numbers = #tpu.dot_dimension_numbers<[1], [0], [0], [1], [0, 0, 1, 1], [], []>} : vector<8x128xf32>, vector<128x128xf32>, vector<8x128xf32> -> vector<8x128xf32>
    %17 = arith.addf %15, %16 : vector<8x128xf32>
    %18 = math.tanh %17 : vector<8x128xf32>
    %c8_19 = arith.constant 8 : index
    %c0_20 = arith.constant 0 : index
    %19 = vector.load %arg14[%c8_19, %c0_20] : memref<64x128xf32, #tpu.memory_space<vmem>>, vector<8x128xf32>
    tpu.vector_store %arg14[%c8_19, %c0_20], %18 {strides = array<i32>} : memref<64x128xf32, #tpu.memory_space<vmem>>, vector<8x128xf32>,
    %c16 = arith.constant 16 : index
    %c0_21 = arith.constant 0 : index
    %20 = vector.load %arg13[%c16, %c0_21] : memref<64x128xf32, #tpu.memory_space<vmem>>, vector<8x128xf32>
    %cst_22 = arith.constant dense<0.000000e+00> : vector<8x128xf32>
    %21 = tpu.matmul %18, %1, %cst_22 {dimension_numbers = #tpu.dot_dimension_numbers<[1], [0], [0], [1], [0, 0, 1, 1], [], []>} : vector<8x128xf32>, vector<128x128xf32>, vector<8x128xf32> -> vector<8x128xf32>
    %22 = arith.addf %20, %21 : vector<8x128xf32>
    %23 = math.tanh %22 : vector<8x128xf32>
    %c16_23 = arith.constant 16 : index
    %c0_24 = arith.constant 0 : index
    %24 = vector.load %arg14[%c16_23, %c0_24] : memref<64x128xf32, #tpu.memory_space<vmem>>, vector<8x128xf32>
    tpu.vector_store %arg14[%c16_23, %c0_24], %23 {strides = array<i32>} : memref<64x128xf32, #tpu.memory_space<vmem>>, vector<8x128xf32>,
    %c24 = arith.constant 24 : index
    %c0_25 = arith.constant 0 : index
    %25 = vector.load %arg13[%c24, %c0_25] : memref<64x128xf32, #tpu.memory_space<vmem>>, vector<8x128xf32>
    %cst_26 = arith.constant dense<0.000000e+00> : vector<8x128xf32>
    %26 = tpu.matmul %23, %1, %cst_26 {dimension_numbers = #tpu.dot_dimension_numbers<[1], [0], [0], [1], [0, 0, 1, 1], [], []>} : vector<8x128xf32>, vector<128x128xf32>, vector<8x128xf32> -> vector<8x128xf32>
    %27 = arith.addf %25, %26 : vector<8x128xf32>
    %28 = math.tanh %27 : vector<8x128xf32>
    %c24_27 = arith.constant 24 : index
    %c0_28 = arith.constant 0 : index
    %29 = vector.load %arg14[%c24_27, %c0_28] : memref<64x128xf32, #tpu.memory_space<vmem>>, vector<8x128xf32>
    tpu.vector_store %arg14[%c24_27, %c0_28], %28 {strides = array<i32>} : memref<64x128xf32, #tpu.memory_space<vmem>>, vector<8x128xf32>,
    %c32 = arith.constant 32 : index
    %c0_29 = arith.constant 0 : index
    %30 = vector.load %arg13[%c32, %c0_29] : memref<64x128xf32, #tpu.memory_space<vmem>>, vector<8x128xf32>
    %cst_30 = arith.constant dense<0.000000e+00> : vector<8x128xf32>
    %31 = tpu.matmul %28, %1, %cst_30 {dimension_numbers = #tpu.dot_dimension_numbers<[1], [0], [0], [1], [0, 0, 1, 1], [], []>} : vector<8x128xf32>, vector<128x128xf32>, vector<8x128xf32> -> vector<8x128xf32>
    %32 = arith.addf %30, %31 : vector<8x128xf32>
    %33 = math.tanh %32 : vector<8x128xf32>
    %c32_31 = arith.constant 32 : index
    %c0_32 = arith.constant 0 : index
    %34 = vector.load %arg14[%c32_31, %c0_32] : memref<64x128xf32, #tpu.memory_space<vmem>>, vector<8x128xf32>
    tpu.vector_store %arg14[%c32_31, %c0_32], %33 {strides = array<i32>} : memref<64x128xf32, #tpu.memory_space<vmem>>, vector<8x128xf32>,
    %c40 = arith.constant 40 : index
    %c0_33 = arith.constant 0 : index
    %35 = vector.load %arg13[%c40, %c0_33] : memref<64x128xf32, #tpu.memory_space<vmem>>, vector<8x128xf32>
    %cst_34 = arith.constant dense<0.000000e+00> : vector<8x128xf32>
    %36 = tpu.matmul %33, %1, %cst_34 {dimension_numbers = #tpu.dot_dimension_numbers<[1], [0], [0], [1], [0, 0, 1, 1], [], []>} : vector<8x128xf32>, vector<128x128xf32>, vector<8x128xf32> -> vector<8x128xf32>
    %37 = arith.addf %35, %36 : vector<8x128xf32>
    %38 = math.tanh %37 : vector<8x128xf32>
    %c40_35 = arith.constant 40 : index
    %c0_36 = arith.constant 0 : index
    %39 = vector.load %arg14[%c40_35, %c0_36] : memref<64x128xf32, #tpu.memory_space<vmem>>, vector<8x128xf32>
    tpu.vector_store %arg14[%c40_35, %c0_36], %38 {strides = array<i32>} : memref<64x128xf32, #tpu.memory_space<vmem>>, vector<8x128xf32>,
    %c48 = arith.constant 48 : index
    %c0_37 = arith.constant 0 : index
    %40 = vector.load %arg13[%c48, %c0_37] : memref<64x128xf32, #tpu.memory_space<vmem>>, vector<8x128xf32>
    %cst_38 = arith.constant dense<0.000000e+00> : vector<8x128xf32>
    %41 = tpu.matmul %38, %1, %cst_38 {dimension_numbers = #tpu.dot_dimension_numbers<[1], [0], [0], [1], [0, 0, 1, 1], [], []>} : vector<8x128xf32>, vector<128x128xf32>, vector<8x128xf32> -> vector<8x128xf32>
    %42 = arith.addf %40, %41 : vector<8x128xf32>
    %43 = math.tanh %42 : vector<8x128xf32>
    %c48_39 = arith.constant 48 : index
    %c0_40 = arith.constant 0 : index
    %44 = vector.load %arg14[%c48_39, %c0_40] : memref<64x128xf32, #tpu.memory_space<vmem>>, vector<8x128xf32>
    tpu.vector_store %arg14[%c48_39, %c0_40], %43 {strides = array<i32>} : memref<64x128xf32, #tpu.memory_space<vmem>>, vector<8x128xf32>,
    %c56 = arith.constant 56 : index
    %c0_41 = arith.constant 0 : index
    %45 = vector.load %arg13[%c56, %c0_41] : memref<64x128xf32, #tpu.memory_space<vmem>>, vector<8x128xf32>
    %cst_42 = arith.constant dense<0.000000e+00> : vector<8x128xf32>
    %46 = tpu.matmul %43, %1, %cst_42 {dimension_numbers = #tpu.dot_dimension_numbers<[1], [0], [0], [1], [0, 0, 1, 1], [], []>} : vector<8x128xf32>, vector<128x128xf32>, vector<8x128xf32> -> vector<8x128xf32>
    %47 = arith.addf %45, %46 : vector<8x128xf32>
    %48 = math.tanh %47 : vector<8x128xf32>
    %c56_43 = arith.constant 56 : index
    %c0_44 = arith.constant 0 : index
    %49 = vector.load %arg14[%c56_43, %c0_44] : memref<64x128xf32, #tpu.memory_space<vmem>>, vector<8x128xf32>
    tpu.vector_store %arg14[%c56_43, %c0_44], %48 {strides = array<i32>} : memref<64x128xf32, #tpu.memory_space<vmem>>, vector<8x128xf32>,
    %c0_45 = arith.constant 0 : index
    %c0_46 = arith.constant 0 : index
    %c0_47 = arith.constant 0 : index
    %50 = vector.load %arg12[%c0_45, %c0_46, %c0_47] : memref<2x8x128xf32, #tpu.memory_space<vmem>>, vector<1x8x128xf32>
    %51 = vector.shape_cast %50 : vector<1x8x128xf32> to vector<8x128xf32>
    %52 = vector.shape_cast %48 : vector<8x128xf32> to vector<1x8x128xf32>
    tpu.vector_store %arg12[%c0_45, %c0_46, %c0_47], %52 {strides = array<i32>} : memref<2x8x128xf32, #tpu.memory_space<vmem>>, vector<1x8x128xf32>,
    %c0_48 = arith.constant 0 : index
    %c0_49 = arith.constant 0 : index
    %53 = vector.load %arg6[%c0_48, %c0_49] : memref<128x128xf32, #tpu.memory_space<vmem>>, vector<128x128xf32>
    %c0_50 = arith.constant 0 : index
    %c0_51 = arith.constant 0 : index
    %54 = vector.load %arg7[%c0_50, %c0_51] : memref<128x128xf32, #tpu.memory_space<vmem>>, vector<128x128xf32>
    %c0_52 = arith.constant 0 : index
    %c0_53 = arith.constant 0 : index
    %55 = vector.load %arg8[%c0_52, %c0_53] : memref<1x128xf32, #tpu.memory_space<vmem>>, vector<1x128xf32>
    %c0_54 = arith.constant 0 : index
    %c0_55 = arith.constant 0 : index
    %56 = vector.load %arg14[%c0_54, %c0_55] : memref<64x128xf32, #tpu.memory_space<vmem>>, vector<64x128xf32>
    %cst_56 = arith.constant dense<0.000000e+00> : vector<64x128xf32>
    %57 = tpu.matmul %56, %53, %cst_56 {dimension_numbers = #tpu.dot_dimension_numbers<[1], [0], [0], [1], [0, 0, 1, 1], [], []>} : vector<64x128xf32>, vector<128x128xf32>, vector<64x128xf32> -> vector<64x128xf32>
    %58 = vector.broadcast %55 : vector<1x128xf32> to vector<64x128xf32>
    %59 = arith.addf %57, %58 : vector<64x128xf32>
    %c0_57 = arith.constant 0 : index
    %c0_58 = arith.constant 0 : index
    %60 = vector.load %arg13[%c0_57, %c0_58] : memref<64x128xf32, #tpu.memory_space<vmem>>, vector<64x128xf32>
    tpu.vector_store %arg13[%c0_57, %c0_58], %59 {strides = array<i32>} : memref<64x128xf32, #tpu.memory_space<vmem>>, vector<64x128xf32>,
    %c1 = arith.constant 1 : index
    %c0_59 = arith.constant 0 : index
    %c0_60 = arith.constant 0 : index
    %61 = vector.load %arg2[%c1, %c0_59, %c0_60] : memref<2x8x128xf32, #tpu.memory_space<vmem>>, vector<1x8x128xf32>
    %62 = vector.shape_cast %61 : vector<1x8x128xf32> to vector<8x128xf32>
    %c0_61 = arith.constant 0 : index
    %c0_62 = arith.constant 0 : index
    %63 = vector.load %arg13[%c0_61, %c0_62] : memref<64x128xf32, #tpu.memory_space<vmem>>, vector<8x128xf32>
    %cst_63 = arith.constant dense<0.000000e+00> : vector<8x128xf32>
    %64 = tpu.matmul %62, %54, %cst_63 {dimension_numbers = #tpu.dot_dimension_numbers<[1], [0], [0], [1], [0, 0, 1, 1], [], []>} : vector<8x128xf32>, vector<128x128xf32>, vector<8x128xf32> -> vector<8x128xf32>
    %65 = arith.addf %63, %64 : vector<8x128xf32>
    %66 = math.tanh %65 : vector<8x128xf32>
    %c0_64 = arith.constant 0 : index
    %c0_65 = arith.constant 0 : index
    %67 = vector.load %arg14[%c0_64, %c0_65] : memref<64x128xf32, #tpu.memory_space<vmem>>, vector<8x128xf32>
    tpu.vector_store %arg14[%c0_64, %c0_65], %66 {strides = array<i32>} : memref<64x128xf32, #tpu.memory_space<vmem>>, vector<8x128xf32>,
    %c8_66 = arith.constant 8 : index
    %c0_67 = arith.constant 0 : index
    %68 = vector.load %arg13[%c8_66, %c0_67] : memref<64x128xf32, #tpu.memory_space<vmem>>, vector<8x128xf32>
    %cst_68 = arith.constant dense<0.000000e+00> : vector<8x128xf32>
    %69 = tpu.matmul %66, %54, %cst_68 {dimension_numbers = #tpu.dot_dimension_numbers<[1], [0], [0], [1], [0, 0, 1, 1], [], []>} : vector<8x128xf32>, vector<128x128xf32>, vector<8x128xf32> -> vector<8x128xf32>
    %70 = arith.addf %68, %69 : vector<8x128xf32>
    %71 = math.tanh %70 : vector<8x128xf32>
    %c8_69 = arith.constant 8 : index
    %c0_70 = arith.constant 0 : index
    %72 = vector.load %arg14[%c8_69, %c0_70] : memref<64x128xf32, #tpu.memory_space<vmem>>, vector<8x128xf32>
    tpu.vector_store %arg14[%c8_69, %c0_70], %71 {strides = array<i32>} : memref<64x128xf32, #tpu.memory_space<vmem>>, vector<8x128xf32>,
    %c16_71 = arith.constant 16 : index
    %c0_72 = arith.constant 0 : index
    %73 = vector.load %arg13[%c16_71, %c0_72] : memref<64x128xf32, #tpu.memory_space<vmem>>, vector<8x128xf32>
    %cst_73 = arith.constant dense<0.000000e+00> : vector<8x128xf32>
    %74 = tpu.matmul %71, %54, %cst_73 {dimension_numbers = #tpu.dot_dimension_numbers<[1], [0], [0], [1], [0, 0, 1, 1], [], []>} : vector<8x128xf32>, vector<128x128xf32>, vector<8x128xf32> -> vector<8x128xf32>
    %75 = arith.addf %73, %74 : vector<8x128xf32>
    %76 = math.tanh %75 : vector<8x128xf32>
    %c16_74 = arith.constant 16 : index
    %c0_75 = arith.constant 0 : index
    %77 = vector.load %arg14[%c16_74, %c0_75] : memref<64x128xf32, #tpu.memory_space<vmem>>, vector<8x128xf32>
    tpu.vector_store %arg14[%c16_74, %c0_75], %76 {strides = array<i32>} : memref<64x128xf32, #tpu.memory_space<vmem>>, vector<8x128xf32>,
    %c24_76 = arith.constant 24 : index
    %c0_77 = arith.constant 0 : index
    %78 = vector.load %arg13[%c24_76, %c0_77] : memref<64x128xf32, #tpu.memory_space<vmem>>, vector<8x128xf32>
    %cst_78 = arith.constant dense<0.000000e+00> : vector<8x128xf32>
    %79 = tpu.matmul %76, %54, %cst_78 {dimension_numbers = #tpu.dot_dimension_numbers<[1], [0], [0], [1], [0, 0, 1, 1], [], []>} : vector<8x128xf32>, vector<128x128xf32>, vector<8x128xf32> -> vector<8x128xf32>
    %80 = arith.addf %78, %79 : vector<8x128xf32>
    %81 = math.tanh %80 : vector<8x128xf32>
    %c24_79 = arith.constant 24 : index
    %c0_80 = arith.constant 0 : index
    %82 = vector.load %arg14[%c24_79, %c0_80] : memref<64x128xf32, #tpu.memory_space<vmem>>, vector<8x128xf32>
    tpu.vector_store %arg14[%c24_79, %c0_80], %81 {strides = array<i32>} : memref<64x128xf32, #tpu.memory_space<vmem>>, vector<8x128xf32>,
    %c32_81 = arith.constant 32 : index
    %c0_82 = arith.constant 0 : index
    %83 = vector.load %arg13[%c32_81, %c0_82] : memref<64x128xf32, #tpu.memory_space<vmem>>, vector<8x128xf32>
    %cst_83 = arith.constant dense<0.000000e+00> : vector<8x128xf32>
    %84 = tpu.matmul %81, %54, %cst_83 {dimension_numbers = #tpu.dot_dimension_numbers<[1], [0], [0], [1], [0, 0, 1, 1], [], []>} : vector<8x128xf32>, vector<128x128xf32>, vector<8x128xf32> -> vector<8x128xf32>
    %85 = arith.addf %83, %84 : vector<8x128xf32>
    %86 = math.tanh %85 : vector<8x128xf32>
    %c32_84 = arith.constant 32 : index
    %c0_85 = arith.constant 0 : index
    %87 = vector.load %arg14[%c32_84, %c0_85] : memref<64x128xf32, #tpu.memory_space<vmem>>, vector<8x128xf32>
    tpu.vector_store %arg14[%c32_84, %c0_85], %86 {strides = array<i32>} : memref<64x128xf32, #tpu.memory_space<vmem>>, vector<8x128xf32>,
    %c40_86 = arith.constant 40 : index
    %c0_87 = arith.constant 0 : index
    %88 = vector.load %arg13[%c40_86, %c0_87] : memref<64x128xf32, #tpu.memory_space<vmem>>, vector<8x128xf32>
    %cst_88 = arith.constant dense<0.000000e+00> : vector<8x128xf32>
    %89 = tpu.matmul %86, %54, %cst_88 {dimension_numbers = #tpu.dot_dimension_numbers<[1], [0], [0], [1], [0, 0, 1, 1], [], []>} : vector<8x128xf32>, vector<128x128xf32>, vector<8x128xf32> -> vector<8x128xf32>
    %90 = arith.addf %88, %89 : vector<8x128xf32>
    %91 = math.tanh %90 : vector<8x128xf32>
    %c40_89 = arith.constant 40 : index
    %c0_90 = arith.constant 0 : index
    %92 = vector.load %arg14[%c40_89, %c0_90] : memref<64x128xf32, #tpu.memory_space<vmem>>, vector<8x128xf32>
    tpu.vector_store %arg14[%c40_89, %c0_90], %91 {strides = array<i32>} : memref<64x128xf32, #tpu.memory_space<vmem>>, vector<8x128xf32>,
    %c48_91 = arith.constant 48 : index
    %c0_92 = arith.constant 0 : index
    %93 = vector.load %arg13[%c48_91, %c0_92] : memref<64x128xf32, #tpu.memory_space<vmem>>, vector<8x128xf32>
    %cst_93 = arith.constant dense<0.000000e+00> : vector<8x128xf32>
    %94 = tpu.matmul %91, %54, %cst_93 {dimension_numbers = #tpu.dot_dimension_numbers<[1], [0], [0], [1], [0, 0, 1, 1], [], []>} : vector<8x128xf32>, vector<128x128xf32>, vector<8x128xf32> -> vector<8x128xf32>
    %95 = arith.addf %93, %94 : vector<8x128xf32>
    %96 = math.tanh %95 : vector<8x128xf32>
    %c48_94 = arith.constant 48 : index
    %c0_95 = arith.constant 0 : index
    %97 = vector.load %arg14[%c48_94, %c0_95] : memref<64x128xf32, #tpu.memory_space<vmem>>, vector<8x128xf32>
    tpu.vector_store %arg14[%c48_94, %c0_95], %96 {strides = array<i32>} : memref<64x128xf32, #tpu.memory_space<vmem>>, vector<8x128xf32>,
    %c56_96 = arith.constant 56 : index
    %c0_97 = arith.constant 0 : index
    %98 = vector.load %arg13[%c56_96, %c0_97] : memref<64x128xf32, #tpu.memory_space<vmem>>, vector<8x128xf32>
    %cst_98 = arith.constant dense<0.000000e+00> : vector<8x128xf32>
    %99 = tpu.matmul %96, %54, %cst_98 {dimension_numbers = #tpu.dot_dimension_numbers<[1], [0], [0], [1], [0, 0, 1, 1], [], []>} : vector<8x128xf32>, vector<128x128xf32>, vector<8x128xf32> -> vector<8x128xf32>
    %100 = arith.addf %98, %99 : vector<8x128xf32>
    %101 = math.tanh %100 : vector<8x128xf32>
    %c56_99 = arith.constant 56 : index
    %c0_100 = arith.constant 0 : index
    %102 = vector.load %arg14[%c56_99, %c0_100] : memref<64x128xf32, #tpu.memory_space<vmem>>, vector<8x128xf32>
    tpu.vector_store %arg14[%c56_99, %c0_100], %101 {strides = array<i32>} : memref<64x128xf32, #tpu.memory_space<vmem>>, vector<8x128xf32>,
    %c1_101 = arith.constant 1 : index
    %c0_102 = arith.constant 0 : index
    %c0_103 = arith.constant 0 : index
    %103 = vector.load %arg12[%c1_101, %c0_102, %c0_103] : memref<2x8x128xf32, #tpu.memory_space<vmem>>, vector<1x8x128xf32>
    %104 = vector.shape_cast %103 : vector<1x8x128xf32> to vector<8x128xf32>
    %105 = vector.shape_cast %101 : vector<8x128xf32> to vector<1x8x128xf32>
    tpu.vector_store %arg12[%c1_101, %c0_102, %c0_103], %105 {strides = array<i32>} : memref<2x8x128xf32, #tpu.memory_space<vmem>>, vector<1x8x128xf32>,
    %c0_104 = arith.constant 0 : index
    %c0_105 = arith.constant 0 : index
    %106 = vector.load %arg14[%c0_104, %c0_105] : memref<64x128xf32, #tpu.memory_space<vmem>>, vector<64x128xf32>
    %c0_106 = arith.constant 0 : index
    %c0_107 = arith.constant 0 : index
    %107 = vector.load %arg9[%c0_106, %c0_107] : memref<128x128xf32, #tpu.memory_space<vmem>>, vector<128x128xf32>
    %cst_108 = arith.constant dense<0.000000e+00> : vector<64x128xf32>
    %108 = tpu.matmul %106, %107, %cst_108 {dimension_numbers = #tpu.dot_dimension_numbers<[1], [0], [0], [1], [0, 0, 1, 1], [], []>} : vector<64x128xf32>, vector<128x128xf32>, vector<64x128xf32> -> vector<64x128xf32>
    %c0_109 = arith.constant 0 : index
    %c0_110 = arith.constant 0 : index
    %109 = vector.load %arg10[%c0_109, %c0_110] : memref<1x128xf32, #tpu.memory_space<vmem>>, vector<1x128xf32>
    %110 = vector.broadcast %109 : vector<1x128xf32> to vector<64x128xf32>
    %111 = arith.addf %108, %110 : vector<64x128xf32>
    %c0_111 = arith.constant 0 : index
    %c0_112 = arith.constant 0 : index
    %112 = vector.load %arg11[%c0_111, %c0_112] : memref<64x128xf32, #tpu.memory_space<vmem>>, vector<64x128xf32>
    tpu.vector_store %arg11[%c0_111, %c0_112], %111 {strides = array<i32>} : memref<64x128xf32, #tpu.memory_space<vmem>>, vector<64x128xf32>,
    return
  }
  func.func @transform_0(%arg0: i32) -> (i32, i32) {
    %c0_i32 = arith.constant 0 : i32
    %c0_i32_0 = arith.constant 0 : i32
    %c0_i32_1 = arith.constant 0 : i32
    return %c0_i32, %c0_i32_0 : i32, i32
  }
  func.func @transform_1(%arg0: i32) -> (i32, i32, i32) {
    %c0_i32 = arith.constant 0 : i32
    %c0_i32_0 = arith.constant 0 : i32
    %c0_i32_1 = arith.constant 0 : i32
    %c0_i32_2 = arith.constant 0 : i32
    return %c0_i32, %c0_i32_0, %c0_i32_1 : i32, i32, i32
  }
  func.func @transform_2(%arg0: i32) -> (i32, i32) {
    %c0_i32 = arith.constant 0 : i32
    %c0_i32_0 = arith.constant 0 : i32
    %c0_i32_1 = arith.constant 0 : i32
    return %c0_i32, %c0_i32_0 : i32, i32
  }
  func.func @transform_3(%arg0: i32) -> (i32, i32) {
    %c0_i32 = arith.constant 0 : i32
    %c0_i32_0 = arith.constant 0 : i32
    %c0_i32_1 = arith.constant 0 : i32
    return %c0_i32, %c0_i32_0 : i32, i32
  }
  func.func @transform_4(%arg0: i32) -> (i32, i32) {
    %c0_i32 = arith.constant 0 : i32
    %c0_i32_0 = arith.constant 0 : i32
    %c0_i32_1 = arith.constant 0 : i32
    return %c0_i32, %c0_i32_0 : i32, i32
  }
  func.func @transform_5(%arg0: i32) -> (i32, i32) {
    %c0_i32 = arith.constant 0 : i32
    %c0_i32_0 = arith.constant 0 : i32
    %c0_i32_1 = arith.constant 0 : i32
    return %c0_i32, %c0_i32_0 : i32, i32
  }
  func.func @transform_6(%arg0: i32) -> (i32, i32) {
    %c0_i32 = arith.constant 0 : i32
    %c0_i32_0 = arith.constant 0 : i32
    %c0_i32_1 = arith.constant 0 : i32
    return %c0_i32, %c0_i32_0 : i32, i32
  }
  func.func @transform_7(%arg0: i32) -> (i32, i32) {
    %c0_i32 = arith.constant 0 : i32
    %c0_i32_0 = arith.constant 0 : i32
    %c0_i32_1 = arith.constant 0 : i32
    return %c0_i32, %c0_i32_0 : i32, i32
  }
  func.func @transform_8(%arg0: i32) -> (i32, i32) {
    %c0_i32 = arith.constant 0 : i32
    %c0_i32_0 = arith.constant 0 : i32
    %c0_i32_1 = arith.constant 0 : i32
    return %c0_i32, %c0_i32_0 : i32, i32
  }
  func.func @transform_9(%arg0: i32) -> (i32, i32) {
    %c0_i32 = arith.constant 0 : i32
    %c0_i32_0 = arith.constant 0 : i32
    %c0_i32_1 = arith.constant 0 : i32
    return %c0_i32, %c0_i32_0 : i32, i32
  }
  func.func @transform_10(%arg0: i32) -> (i32, i32) {
    %c0_i32 = arith.constant 0 : i32
    %c0_i32_0 = arith.constant 0 : i32
    %c0_i32_1 = arith.constant 0 : i32
    return %c0_i32, %c0_i32_0 : i32, i32
  }
  func.func @transform_11(%arg0: i32) -> (i32, i32, i32) {
    %c0_i32 = arith.constant 0 : i32
    %c0_i32_0 = arith.constant 0 : i32
    %c0_i32_1 = arith.constant 0 : i32
    %c0_i32_2 = arith.constant 0 : i32
    return %c0_i32, %c0_i32_0, %c0_i32_1 : i32, i32, i32
  }
}

</mosaic_0001>

<llo_original>
// kernel: tpu_custom_call.1
$region0: #{tpu_custom_call.1}
  #allocation0 [shape = 'u32[]', space=smem, size = 0x4, offset = 0x4, fixed_abs, tag = 'smem constant byte address 0x4 - core index']
  #allocation1 [shape = 'u32[72,128]{1,0:T(1,128)}', space=vmem, size = 0x9000, scoped, tag = 'internal scratch']
  #allocation2 [shape = 'f32[64,128]{1,0:T(8,128)}', space=vmem, size = 0x8000, scoped, tag = 'scratch operand']
  #allocation3 [shape = 'f32[64,128]{1,0:T(8,128)}', space=vmem, size = 0x8000, scoped, tag = 'scratch operand']
  %s0 = inlined_call_operand.hbm [shape: f32[64,128], index: 0, kind: input, shape index: {}]
  %s1 = inlined_call_operand.hbm [shape: f32[2,8,128], index: 1, kind: input, shape index: {}]
  %s2 = inlined_call_operand.hbm [shape: f32[128,128], index: 2, kind: input, shape index: {}]
  %s3 = inlined_call_operand.hbm [shape: f32[128,128], index: 3, kind: input, shape index: {}]
  %s4 = inlined_call_operand.vmem [shape: f32[1,128], index: 4, kind: input, shape index: {}]
  %s5 = inlined_call_operand.hbm [shape: f32[128,128], index: 5, kind: input, shape index: {}]
  %s6 = inlined_call_operand.hbm [shape: f32[128,128], index: 6, kind: input, shape index: {}]
  %s7 = inlined_call_operand.vmem [shape: f32[1,128], index: 7, kind: input, shape index: {}]
  %s8 = inlined_call_operand.hbm [shape: f32[128,128], index: 8, kind: input, shape index: {}]
  %s9 = inlined_call_operand.vmem [shape: f32[1,128], index: 9, kind: input, shape index: {}]
  %s10 = inlined_call_operand.hbm [shape: f32[64,128], index: 10, kind: output, shape index: {0}]
  %s11 = inlined_call_operand.hbm [shape: f32[2,8,128], index: 11, kind: output, shape index: {1}]
  %12 = xla_tuple %s10, %s11
  %s13 = sld [smem:[#allocation0]]
  $region86: #{tpu_custom_call.1} parent=0
    _
  %s15 = ssub.s32 1, %s13
  %s16 = scalar_select 0, %s15, %s13
  $region1: #{tpu_custom_call.1} parent=0
    #allocation4 [shape = 'u8[32768]{0}', space=vmem, size = 0x8000, scoped, tag = 'input window, operand 0, single buffered']
    #allocation5 [shape = 's32[1]{0}', space=sflag, size = 0x4, scoped, tag = 'scoped memory for tpu_custom_call.1']
    #allocation6 [shape = 's32[1]{0}', space=sflag, size = 0x4, scoped, tag = 'scoped memory for tpu_custom_call.1']
    #allocation7 [shape = 'u8[8192]{0}', space=vmem, size = 0x2000, scoped, tag = 'input window, operand 1, single buffered']
    #allocation8 [shape = 's32[1]{0}', space=sflag, size = 0x4, scoped, tag = 'scoped memory for tpu_custom_call.1']
    #allocation9 [shape = 'u8[65536]{0}', space=vmem, size = 0x10000, scoped, tag = 'input window, operand 2, single buffered']
    #allocation10 [shape = 'u8[65536]{0}', space=vmem, size = 0x10000, scoped, tag = 'input window, operand 3, single buffered']
    #allocation11 [shape = 's32[1]{0}', space=sflag, size = 0x4, scoped, tag = 'scoped memory for tpu_custom_call.1']
    #allocation12 [shape = 'u8[65536]{0}', space=vmem, size = 0x10000, scoped, tag = 'input window, operand 5, single buffered']
    #allocation13 [shape = 'u8[65536]{0}', space=vmem, size = 0x10000, scoped, tag = 'input window, operand 6, single buffered']
    #allocation14 [shape = 's32[1]{0}', space=sflag, size = 0x4, scoped, tag = 'scoped memory for tpu_custom_call.1']
    #allocation15 [shape = 'u8[65536]{0}', space=vmem, size = 0x10000, scoped, tag = 'input window, operand 8, single buffered']
    #allocation16 [shape = 'u8[32768]{0}', space=vmem, size = 0x8000, scoped, tag = 'output window, operand 0, single buffered']
    #allocation17 [shape = 'u8[8192]{0}', space=vmem, size = 0x2000, scoped, tag = 'output window, operand 1, single buffered']
    #allocation18 [shape = 's32[1]{0}', space=sflag, size = 0x4, scoped, tag = 'scoped memory for tpu_custom_call.1']
    %17 = vsyncpa [#allocation5], 0
    %18 = vsyncpa [#allocation8], 0
    %19 = vsyncpa [#allocation11], 0
    %20 = vsyncpa [#allocation14], 0
    %21 = vsyncpa [#allocation6], 0
    %22 = vsyncpa [#allocation18], 0
    // Predicated region
    $region2: #{tpu_custom_call.1} parent=1 // pred_check
      _
    $region3: #{tpu_custom_call.1} parent=1 // pred_check_branch
      %24 = sbr.rel (0) target = $region5
    $region4: #{tpu_custom_call.1} parent=1 // pred_region
      %26 = vsyncadd [#allocation5], 0
      %s27 = sshll.u32 %s0, 4
      %s28 = int_to_ptr.hbm [resolvable:$true] %s27
      %s29 = sshll.u32 [#allocation4], 4
      %s30 = int_to_ptr.vmem [resolvable:$true] %s29
      %35 = dma.hbm_to_vmem [thread:$0]  %s28, 1024, %s30, [#allocation5], 128, 128, 8
    $region5: #{tpu_custom_call.1} parent=1 // pred_fallthru
      _
    // Predicated region
    $region6: #{tpu_custom_call.1} parent=1 // pred_check
      _
    $region7: #{tpu_custom_call.1} parent=1 // pred_check_branch
      %37 = sbr.rel (0) target = $region9
    $region8: #{tpu_custom_call.1} parent=1 // pred_region
      %39 = vsyncadd [#allocation8], 0
      %s40 = sshll.u32 %s1, 4
      %s41 = int_to_ptr.hbm [resolvable:$true] %s40
      %s42 = sshll.u32 [#allocation7], 4
      %s43 = int_to_ptr.vmem [resolvable:$true] %s42
      %48 = dma.hbm_to_vmem [thread:$0]  %s41, 256, %s43, [#allocation8], 128, 128, 8
    $region9: #{tpu_custom_call.1} parent=1 // pred_fallthru
      _
    // Predicated region
    $region10: #{tpu_custom_call.1} parent=1 // pred_check
      _
    $region11: #{tpu_custom_call.1} parent=1 // pred_check_branch
      %50 = sbr.rel (0) target = $region13
    $region12: #{tpu_custom_call.1} parent=1 // pred_region
      %52 = vsyncadd [#allocation8], 0
      %s53 = sshll.u32 %s2, 4
      %s54 = int_to_ptr.hbm [resolvable:$true] %s53
      %s55 = sshll.u32 [#allocation9], 4
      %s56 = int_to_ptr.vmem [resolvable:$true] %s55
      %61 = dma.hbm_to_vmem [thread:$0]  %s54, 2048, %s56, [#allocation8], 128, 128, 8
    $region13: #{tpu_custom_call.1} parent=1 // pred_fallthru
      _
    // Predicated region
    $region14: #{tpu_custom_call.1} parent=1 // pred_check
      _
    $region15: #{tpu_custom_call.1} parent=1 // pred_check_branch
      %63 = sbr.rel (0) target = $region17
    $region16: #{tpu_custom_call.1} parent=1 // pred_region
      %65 = vsyncadd [#allocation11], 0
      %s66 = sshll.u32 %s3, 4
      %s67 = int_to_ptr.hbm [resolvable:$true] %s66
      %s68 = sshll.u32 [#allocation10], 4
      %s69 = int_to_ptr.vmem [resolvable:$true] %s68
      %74 = dma.hbm_to_vmem [thread:$0]  %s67, 2048, %s69, [#allocation11], 128, 128, 8
    $region17: #{tpu_custom_call.1} parent=1 // pred_fallthru
      _
    // Predicated region
    $region18: #{tpu_custom_call.1} parent=1 // pred_check
      _
    $region19: #{tpu_custom_call.1} parent=1 // pred_check_branch
      %76 = sbr.rel (0) target = $region21
    $region20: #{tpu_custom_call.1} parent=1 // pred_region
      _
    $region21: #{tpu_custom_call.1} parent=1 // pred_fallthru
      _
    // Predicated region
    $region22: #{tpu_custom_call.1} parent=1 // pred_check
      _
    $region23: #{tpu_custom_call.1} parent=1 // pred_check_branch
      %78 = sbr.rel (0) target = $region25
    $region24: #{tpu_custom_call.1} parent=1 // pred_region
      %80 = vsyncadd [#allocation11], 0
      %s81 = sshll.u32 %s5, 4
      %s82 = int_to_ptr.hbm [resolvable:$true] %s81
      %s83 = sshll.u32 [#allocation12], 4
      %s84 = int_to_ptr.vmem [resolvable:$true] %s83
      %89 = dma.hbm_to_vmem [thread:$0]  %s82, 2048, %s84, [#allocation11], 128, 128, 8
    $region25: #{tpu_custom_call.1} parent=1 // pred_fallthru
      _
    // Predicated region
    $region26: #{tpu_custom_call.1} parent=1 // pred_check
      _
    $region27: #{tpu_custom_call.1} parent=1 // pred_check_branch
      %91 = sbr.rel (0) target = $region29
    $region28: #{tpu_custom_call.1} parent=1 // pred_region
      %93 = vsyncadd [#allocation14], 0
      %s94 = sshll.u32 %s6, 4
      %s95 = int_to_ptr.hbm [resolvable:$true] %s94
      %s96 = sshll.u32 [#allocation13], 4
      %s97 = int_to_ptr.vmem [resolvable:$true] %s96
      %102 = dma.hbm_to_vmem [thread:$0]  %s95, 2048, %s97, [#allocation14], 128, 128, 8
    $region29: #{tpu_custom_call.1} parent=1 // pred_fallthru
      _
    // Predicated region
    $region30: #{tpu_custom_call.1} parent=1 // pred_check
      _
    $region31: #{tpu_custom_call.1} parent=1 // pred_check_branch
      %104 = sbr.rel (0) target = $region33
    $region32: #{tpu_custom_call.1} parent=1 // pred_region
      _
    $region33: #{tpu_custom_call.1} parent=1 // pred_fallthru
      _
    // Predicated region
    $region34: #{tpu_custom_call.1} parent=1 // pred_check
      _
    $region35: #{tpu_custom_call.1} parent=1 // pred_check_branch
      %106 = sbr.rel (0) target = $region37
    $region36: #{tpu_custom_call.1} parent=1 // pred_region
      %108 = vsyncadd [#allocation14], 0
      %s109 = sshll.u32 %s8, 4
      %s110 = int_to_ptr.hbm [resolvable:$true] %s109
      %s111 = sshll.u32 [#allocation15], 4
      %s112 = int_to_ptr.vmem [resolvable:$true] %s111
      %117 = dma.hbm_to_vmem [thread:$0]  %s110, 2048, %s112, [#allocation14], 128, 128, 8
    $region37: #{tpu_custom_call.1} parent=1 // pred_fallthru
      _
    // Predicated region
    $region38: #{tpu_custom_call.1} parent=1 // pred_check
      _
    $region39: #{tpu_custom_call.1} parent=1 // pred_check_branch
      %119 = sbr.rel (0) target = $region41
    $region40: #{tpu_custom_call.1} parent=1 // pred_region
      _
    $region41: #{tpu_custom_call.1} parent=1 // pred_fallthru
      _
    // Predicated region
    $region42: #{tpu_custom_call.1} parent=1 // pred_check
      _
    $region43: #{tpu_custom_call.1} parent=1 // pred_check_branch
      %121 = sbr.rel (0) target = $region45
    $region44: #{tpu_custom_call.1} parent=1 // pred_region
      %123 = dma.done [#allocation5], 1024
    $region45: #{tpu_custom_call.1} parent=1 // pred_fallthru
      _
    // Predicated region
    $region46: #{tpu_custom_call.1} parent=1 // pred_check
      _
    $region47: #{tpu_custom_call.1} parent=1 // pred_check_branch
      %125 = sbr.rel (0) target = $region49
    $region48: #{tpu_custom_call.1} parent=1 // pred_region
      %127 = dma.done [#allocation8], 256
    $region49: #{tpu_custom_call.1} parent=1 // pred_fallthru
      _
    // Predicated region
    $region50: #{tpu_custom_call.1} parent=1 // pred_check
      _
    $region51: #{tpu_custom_call.1} parent=1 // pred_check_branch
      %129 = sbr.rel (0) target = $region53
    $region52: #{tpu_custom_call.1} parent=1 // pred_region
      %131 = dma.done [#allocation8], 2048
    $region53: #{tpu_custom_call.1} parent=1 // pred_fallthru
      _
    // Predicated region
    $region54: #{tpu_custom_call.1} parent=1 // pred_check
      _
    $region55: #{tpu_custom_call.1} parent=1 // pred_check_branch
      %133 = sbr.rel (0) target = $region57
    $region56: #{tpu_custom_call.1} parent=1 // pred_region
      %135 = dma.done [#allocation11], 2048
    $region57: #{tpu_custom_call.1} parent=1 // pred_fallthru
      _
    // Predicated region
    $region58: #{tpu_custom_call.1} parent=1 // pred_check
      _
    $region59: #{tpu_custom_call.1} parent=1 // pred_check_branch
      %137 = sbr.rel (0) target = $region61
    $region60: #{tpu_custom_call.1} parent=1 // pred_region
      %139 = dma.done [#allocation11], 2048
    $region61: #{tpu_custom_call.1} parent=1 // pred_fallthru
      _
    // Predicated region
    $region62: #{tpu_custom_call.1} parent=1 // pred_check
      _
    $region63: #{tpu_custom_call.1} parent=1 // pred_check_branch
      %141 = sbr.rel (0) target = $region65
    $region64: #{tpu_custom_call.1} parent=1 // pred_region
      %143 = dma.done [#allocation14], 2048
    $region65: #{tpu_custom_call.1} parent=1 // pred_fallthru
      _
    // Predicated region
    $region66: #{tpu_custom_call.1} parent=1 // pred_check
      _
    $region67: #{tpu_custom_call.1} parent=1 // pred_check_branch
      %145 = sbr.rel (0) target = $region69
    $region68: #{tpu_custom_call.1} parent=1 // pred_region
      %147 = dma.done [#allocation14], 2048
    $region69: #{tpu_custom_call.1} parent=1 // pred_fallthru
      _
    %v148 = vld [vmem:[#allocation9] sm:$0xff]
    %v149 = vld [vmem:[#allocation9 + $0x8] sm:$0xff]
    %v150 = vld [vmem:[#allocation9 + $0x10] sm:$0xff]
    %v151 = vld [vmem:[#allocation9 + $0x18] sm:$0xff]
    %v152 = vld [vmem:[#allocation9 + $0x20] sm:$0xff]
    %v153 = vld [vmem:[#allocation9 + $0x28] sm:$0xff]
    %v154 = vld [vmem:[#allocation9 + $0x30] sm:$0xff]
    %v155 = vld [vmem:[#allocation9 + $0x38] sm:$0xff]
    %v156 = vld [vmem:[#allocation9 + $0x40] sm:$0xff]
    %v157 = vld [vmem:[#allocation9 + $0x48] sm:$0xff]
    %v158 = vld [vmem:[#allocation9 + $0x50] sm:$0xff]
    %v159 = vld [vmem:[#allocation9 + $0x58] sm:$0xff]
    %v160 = vld [vmem:[#allocation9 + $0x60] sm:$0xff]
    %v161 = vld [vmem:[#allocation9 + $0x68] sm:$0xff]
    %v162 = vld [vmem:[#allocation9 + $0x70] sm:$0xff]
    %v163 = vld [vmem:[#allocation9 + $0x78] sm:$0xff]
    %v164 = vld [vmem:[#allocation10] sm:$0xff]
    %v165 = vld [vmem:[#allocation10 + $0x8] sm:$0xff]
    %v166 = vld [vmem:[#allocation10 + $0x10] sm:$0xff]
    %v167 = vld [vmem:[#allocation10 + $0x18] sm:$0xff]
    %v168 = vld [vmem:[#allocation10 + $0x20] sm:$0xff]
    %v169 = vld [vmem:[#allocation10 + $0x28] sm:$0xff]
    %v170 = vld [vmem:[#allocation10 + $0x30] sm:$0xff]
    %v171 = vld [vmem:[#allocation10 + $0x38] sm:$0xff]
    %v172 = vld [vmem:[#allocation10 + $0x40] sm:$0xff]
    %v173 = vld [vmem:[#allocation10 + $0x48] sm:$0xff]
    %v174 = vld [vmem:[#allocation10 + $0x50] sm:$0xff]
    %v175 = vld [vmem:[#allocation10 + $0x58] sm:$0xff]
    %v176 = vld [vmem:[#allocation10 + $0x60] sm:$0xff]
    %v177 = vld [vmem:[#allocation10 + $0x68] sm:$0xff]
    %v178 = vld [vmem:[#allocation10 + $0x70] sm:$0xff]
    %v179 = vld [vmem:[#allocation10 + $0x78] sm:$0xff]
    %v180 = vld [vmem:[%s4] sm:$0x1]
    %v181 = vld [vmem:[#allocation4] sm:$0xff]
    %v182 = vld [vmem:[#allocation4 + $0x8] sm:$0xff]
    %v183 = vld [vmem:[#allocation4 + $0x10] sm:$0xff]
    %v184 = vld [vmem:[#allocation4 + $0x18] sm:$0xff]
    %v185 = vld [vmem:[#allocation4 + $0x20] sm:$0xff]
    %v186 = vld [vmem:[#allocation4 + $0x28] sm:$0xff]
    %v187 = vld [vmem:[#allocation4 + $0x30] sm:$0xff]
    %v188 = vld [vmem:[#allocation4 + $0x38] sm:$0xff]
    %v190 = vperm.slane %v180, 0
    %192 = vmatpush.msra.mxu0 %v163
    %193 = vmatpush.msra.mxu0 %v162
    %194 = vmatpush.msra.mxu0 %v161
    %195 = vmatpush.msra.mxu0 %v160
    %196 = vmatpush.msra.mxu0 %v159
    %197 = vmatpush.msra.mxu0 %v158
    %198 = vmatpush.msra.mxu0 %v157
    %199 = vmatpush.msra.mxu0 %v156
    %200 = vmatpush.msra.mxu0 %v155
    %201 = vmatpush.msra.mxu0 %v154
    %202 = vmatpush.msra.mxu0 %v153
    %203 = vmatpush.msra.mxu0 %v152
    %204 = vmatpush.msra.mxu0 %v151
    %205 = vmatpush.msra.mxu0 %v150
    %206 = vmatpush.msra.mxu0 %v149
    %207 = vmatpush.msra.mxu0 %v148
    %208 = vmatmul.f32.gmra.mxu0 %v181
    %v209 = vpop.f32.mrf.mxu0
    %v210 = vadd.f32 %v190, %v209
    %211 = vmatmul.f32.gmra.mxu0 %v182
    %v212 = vpop.f32.mrf.mxu0
    %v213 = vadd.f32 %v190, %v212
    %214 = vmatmul.f32.gmra.mxu0 %v183
    %v215 = vpop.f32.mrf.mxu0
    %v216 = vadd.f32 %v190, %v215
    %217 = vmatmul.f32.gmra.mxu0 %v184
    %v218 = vpop.f32.mrf.mxu0
    %v219 = vadd.f32 %v190, %v218
    %220 = vmatmul.f32.gmra.mxu0 %v185
    %v221 = vpop.f32.mrf.mxu0
    %v222 = vadd.f32 %v190, %v221
    %223 = vmatmul.f32.gmra.mxu0 %v186
    %v224 = vpop.f32.mrf.mxu0
    %v225 = vadd.f32 %v190, %v224
    %226 = vmatmul.f32.gmra.mxu0 %v187
    %v227 = vpop.f32.mrf.mxu0
    %v228 = vadd.f32 %v190, %v227
    %229 = vmatmul.f32.gmra.mxu0 %v188
    %v230 = vpop.f32.mrf.mxu0
    %v231 = vadd.f32 %v190, %v230
    %232 = vdwg.mxu0
    %233 = vst [vmem:[#allocation2] sm:$0xff] %v210
    %234 = vst [vmem:[#allocation2 + $0x8] sm:$0xff] %v213
    %235 = vst [vmem:[#allocation2 + $0x10] sm:$0xff] %v216
    %236 = vst [vmem:[#allocation2 + $0x18] sm:$0xff] %v219
    %237 = vst [vmem:[#allocation2 + $0x20] sm:$0xff] %v222
    %238 = vst [vmem:[#allocation2 + $0x28] sm:$0xff] %v225
    %239 = vst [vmem:[#allocation2 + $0x30] sm:$0xff] %v228
    %240 = vst [vmem:[#allocation2 + $0x38] sm:$0xff] %v231
    %v241 = vld [vmem:[#allocation7] sm:$0xff]
    %v242 = vld [vmem:[#allocation2] sm:$0xff]
    %243 = vmatpush.msra.mxu0 %v179
    %244 = vmatpush.msra.mxu0 %v178
    %245 = vmatpush.msra.mxu0 %v177
    %246 = vmatpush.msra.mxu0 %v176
    %247 = vmatpush.msra.mxu0 %v175
    %248 = vmatpush.msra.mxu0 %v174
    %249 = vmatpush.msra.mxu0 %v173
    %250 = vmatpush.msra.mxu0 %v172
    %251 = vmatpush.msra.mxu0 %v171
    %252 = vmatpush.msra.mxu0 %v170
    %253 = vmatpush.msra.mxu0 %v169
    %254 = vmatpush.msra.mxu0 %v168
    %255 = vmatpush.msra.mxu0 %v167
    %256 = vmatpush.msra.mxu0 %v166
    %257 = vmatpush.msra.mxu0 %v165
    %258 = vmatpush.msra.mxu0 %v164
    %259 = vmatmul.f32.gmra.mxu0 %v241
    %v260 = vpop.f32.mrf.mxu0
    %v261 = vadd.f32 0.0, %v260
    %262 = vdwg.mxu0
    %v263 = vadd.f32 %v242, %v261
    %v264 = vtanh.pop %v263
    %265 = vst [vmem:[#allocation3] sm:$0xff] %v264
    %v266 = vld [vmem:[#allocation2 + $0x8] sm:$0xff]
    %267 = vmatpush.msra.mxu0 %v179
    %268 = vmatpush.msra.mxu0 %v178
    %269 = vmatpush.msra.mxu0 %v177
    %270 = vmatpush.msra.mxu0 %v176
    %271 = vmatpush.msra.mxu0 %v175
    %272 = vmatpush.msra.mxu0 %v174
    %273 = vmatpush.msra.mxu0 %v173
    %274 = vmatpush.msra.mxu0 %v172
    %275 = vmatpush.msra.mxu0 %v171
    %276 = vmatpush.msra.mxu0 %v170
    %277 = vmatpush.msra.mxu0 %v169
    %278 = vmatpush.msra.mxu0 %v168
    %279 = vmatpush.msra.mxu0 %v167
    %280 = vmatpush.msra.mxu0 %v166
    %281 = vmatpush.msra.mxu0 %v165
    %282 = vmatpush.msra.mxu0 %v164
    %283 = vmatmul.f32.gmra.mxu0 %v264
    %v284 = vpop.f32.mrf.mxu0
    %v285 = vadd.f32 0.0, %v284
    %286 = vdwg.mxu0
    %v287 = vadd.f32 %v266, %v285
    %v288 = vtanh.pop %v287
    %289 = vst [vmem:[#allocation3 + $0x8] sm:$0xff] %v288
    %v290 = vld [vmem:[#allocation2 + $0x10] sm:$0xff]
    %291 = vmatpush.msra.mxu0 %v179
    %292 = vmatpush.msra.mxu0 %v178
    %293 = vmatpush.msra.mxu0 %v177
    %294 = vmatpush.msra.mxu0 %v176
    %295 = vmatpush.msra.mxu0 %v175
    %296 = vmatpush.msra.mxu0 %v174
    %297 = vmatpush.msra.mxu0 %v173
    %298 = vmatpush.msra.mxu0 %v172
    %299 = vmatpush.msra.mxu0 %v171
    %300 = vmatpush.msra.mxu0 %v170
    %301 = vmatpush.msra.mxu0 %v169
    %302 = vmatpush.msra.mxu0 %v168
    %303 = vmatpush.msra.mxu0 %v167
    %304 = vmatpush.msra.mxu0 %v166
    %305 = vmatpush.msra.mxu0 %v165
    %306 = vmatpush.msra.mxu0 %v164
    %307 = vmatmul.f32.gmra.mxu0 %v288
    %v308 = vpop.f32.mrf.mxu0
    %v309 = vadd.f32 0.0, %v308
    %310 = vdwg.mxu0
    %v311 = vadd.f32 %v290, %v309
    %v312 = vtanh.pop %v311
    %313 = vst [vmem:[#allocation3 + $0x10] sm:$0xff] %v312
    %v314 = vld [vmem:[#allocation2 + $0x18] sm:$0xff]
    %315 = vmatpush.msra.mxu0 %v179
    %316 = vmatpush.msra.mxu0 %v178
    %317 = vmatpush.msra.mxu0 %v177
    %318 = vmatpush.msra.mxu0 %v176
    %319 = vmatpush.msra.mxu0 %v175
    %320 = vmatpush.msra.mxu0 %v174
    %321 = vmatpush.msra.mxu0 %v173
    %322 = vmatpush.msra.mxu0 %v172
    %323 = vmatpush.msra.mxu0 %v171
    %324 = vmatpush.msra.mxu0 %v170
    %325 = vmatpush.msra.mxu0 %v169
    %326 = vmatpush.msra.mxu0 %v168
    %327 = vmatpush.msra.mxu0 %v167
    %328 = vmatpush.msra.mxu0 %v166
    %329 = vmatpush.msra.mxu0 %v165
    %330 = vmatpush.msra.mxu0 %v164
    %331 = vmatmul.f32.gmra.mxu0 %v312
    %v332 = vpop.f32.mrf.mxu0
    %v333 = vadd.f32 0.0, %v332
    %334 = vdwg.mxu0
    %v335 = vadd.f32 %v314, %v333
    %v336 = vtanh.pop %v335
    %337 = vst [vmem:[#allocation3 + $0x18] sm:$0xff] %v336
    %v338 = vld [vmem:[#allocation2 + $0x20] sm:$0xff]
    %339 = vmatpush.msra.mxu0 %v179
    %340 = vmatpush.msra.mxu0 %v178
    %341 = vmatpush.msra.mxu0 %v177
    %342 = vmatpush.msra.mxu0 %v176
    %343 = vmatpush.msra.mxu0 %v175
    %344 = vmatpush.msra.mxu0 %v174
    %345 = vmatpush.msra.mxu0 %v173
    %346 = vmatpush.msra.mxu0 %v172
    %347 = vmatpush.msra.mxu0 %v171
    %348 = vmatpush.msra.mxu0 %v170
    %349 = vmatpush.msra.mxu0 %v169
    %350 = vmatpush.msra.mxu0 %v168
    %351 = vmatpush.msra.mxu0 %v167
    %352 = vmatpush.msra.mxu0 %v166
    %353 = vmatpush.msra.mxu0 %v165
    %354 = vmatpush.msra.mxu0 %v164
    %355 = vmatmul.f32.gmra.mxu0 %v336
    %v356 = vpop.f32.mrf.mxu0
    %v357 = vadd.f32 0.0, %v356
    %358 = vdwg.mxu0
    %v359 = vadd.f32 %v338, %v357
    %v360 = vtanh.pop %v359
    %361 = vst [vmem:[#allocation3 + $0x20] sm:$0xff] %v360
    %v362 = vld [vmem:[#allocation2 + $0x28] sm:$0xff]
    %363 = vmatpush.msra.mxu0 %v179
    %364 = vmatpush.msra.mxu0 %v178
    %365 = vmatpush.msra.mxu0 %v177
    %366 = vmatpush.msra.mxu0 %v176
    %367 = vmatpush.msra.mxu0 %v175
    %368 = vmatpush.msra.mxu0 %v174
    %369 = vmatpush.msra.mxu0 %v173
    %370 = vmatpush.msra.mxu0 %v172
    %371 = vmatpush.msra.mxu0 %v171
    %372 = vmatpush.msra.mxu0 %v170
    %373 = vmatpush.msra.mxu0 %v169
    %374 = vmatpush.msra.mxu0 %v168
    %375 = vmatpush.msra.mxu0 %v167
    %376 = vmatpush.msra.mxu0 %v166
    %377 = vmatpush.msra.mxu0 %v165
    %378 = vmatpush.msra.mxu0 %v164
    %379 = vmatmul.f32.gmra.mxu0 %v360
    %v380 = vpop.f32.mrf.mxu0
    %v381 = vadd.f32 0.0, %v380
    %382 = vdwg.mxu0
    %v383 = vadd.f32 %v362, %v381
    %v384 = vtanh.pop %v383
    %385 = vst [vmem:[#allocation3 + $0x28] sm:$0xff] %v384
    %v386 = vld [vmem:[#allocation2 + $0x30] sm:$0xff]
    %387 = vmatpush.msra.mxu0 %v179
    %388 = vmatpush.msra.mxu0 %v178
    %389 = vmatpush.msra.mxu0 %v177
    %390 = vmatpush.msra.mxu0 %v176
    %391 = vmatpush.msra.mxu0 %v175
    %392 = vmatpush.msra.mxu0 %v174
    %393 = vmatpush.msra.mxu0 %v173
    %394 = vmatpush.msra.mxu0 %v172
    %395 = vmatpush.msra.mxu0 %v171
    %396 = vmatpush.msra.mxu0 %v170
    %397 = vmatpush.msra.mxu0 %v169
    %398 = vmatpush.msra.mxu0 %v168
    %399 = vmatpush.msra.mxu0 %v167
    %400 = vmatpush.msra.mxu0 %v166
    %401 = vmatpush.msra.mxu0 %v165
    %402 = vmatpush.msra.mxu0 %v164
    %403 = vmatmul.f32.gmra.mxu0 %v384
    %v404 = vpop.f32.mrf.mxu0
    %v405 = vadd.f32 0.0, %v404
    %406 = vdwg.mxu0
    %v407 = vadd.f32 %v386, %v405
    %v408 = vtanh.pop %v407
    %409 = vst [vmem:[#allocation3 + $0x30] sm:$0xff] %v408
    %v410 = vld [vmem:[#allocation2 + $0x38] sm:$0xff]
    %411 = vmatpush.msra.mxu0 %v179
    %412 = vmatpush.msra.mxu0 %v178
    %413 = vmatpush.msra.mxu0 %v177
    %414 = vmatpush.msra.mxu0 %v176
    %415 = vmatpush.msra.mxu0 %v175
    %416 = vmatpush.msra.mxu0 %v174
    %417 = vmatpush.msra.mxu0 %v173
    %418 = vmatpush.msra.mxu0 %v172
    %419 = vmatpush.msra.mxu0 %v171
    %420 = vmatpush.msra.mxu0 %v170
    %421 = vmatpush.msra.mxu0 %v169
    %422 = vmatpush.msra.mxu0 %v168
    %423 = vmatpush.msra.mxu0 %v167
    %424 = vmatpush.msra.mxu0 %v166
    %425 = vmatpush.msra.mxu0 %v165
    %426 = vmatpush.msra.mxu0 %v164
    %427 = vmatmul.f32.gmra.mxu0 %v408
    %v428 = vpop.f32.mrf.mxu0
    %v429 = vadd.f32 0.0, %v428
    %430 = vdwg.mxu0
    %v431 = vadd.f32 %v410, %v429
    %v432 = vtanh.pop %v431
    %433 = vst [vmem:[#allocation3 + $0x38] sm:$0xff] %v432
    %434 = vst [vmem:[#allocation17] sm:$0xff] %v432
    %v435 = vld [vmem:[#allocation12] sm:$0xff]
    %v436 = vld [vmem:[#allocation12 + $0x8] sm:$0xff]
    %v437 = vld [vmem:[#allocation12 + $0x10] sm:$0xff]
    %v438 = vld [vmem:[#allocation12 + $0x18] sm:$0xff]
    %v439 = vld [vmem:[#allocation12 + $0x20] sm:$0xff]
    %v440 = vld [vmem:[#allocation12 + $0x28] sm:$0xff]
    %v441 = vld [vmem:[#allocation12 + $0x30] sm:$0xff]
    %v442 = vld [vmem:[#allocation12 + $0x38] sm:$0xff]
    %v443 = vld [vmem:[#allocation12 + $0x40] sm:$0xff]
    %v444 = vld [vmem:[#allocation12 + $0x48] sm:$0xff]
    %v445 = vld [vmem:[#allocation12 + $0x50] sm:$0xff]
    %v446 = vld [vmem:[#allocation12 + $0x58] sm:$0xff]
    %v447 = vld [vmem:[#allocation12 + $0x60] sm:$0xff]
    %v448 = vld [vmem:[#allocation12 + $0x68] sm:$0xff]
    %v449 = vld [vmem:[#allocation12 + $0x70] sm:$0xff]
    %v450 = vld [vmem:[#allocation12 + $0x78] sm:$0xff]
    %v451 = vld [vmem:[#allocation13] sm:$0xff]
    %v452 = vld [vmem:[#allocation13 + $0x8] sm:$0xff]
    %v453 = vld [vmem:[#allocation13 + $0x10] sm:$0xff]
    %v454 = vld [vmem:[#allocation13 + $0x18] sm:$0xff]
    %v455 = vld [vmem:[#allocation13 + $0x20] sm:$0xff]
    %v456 = vld [vmem:[#allocation13 + $0x28] sm:$0xff]
    %v457 = vld [vmem:[#allocation13 + $0x30] sm:$0xff]
    %v458 = vld [vmem:[#allocation13 + $0x38] sm:$0xff]
    %v459 = vld [vmem:[#allocation13 + $0x40] sm:$0xff]
    %v460 = vld [vmem:[#allocation13 + $0x48] sm:$0xff]
    %v461 = vld [vmem:[#allocation13 + $0x50] sm:$0xff]
    %v462 = vld [vmem:[#allocation13 + $0x58] sm:$0xff]
    %v463 = vld [vmem:[#allocation13 + $0x60] sm:$0xff]
    %v464 = vld [vmem:[#allocation13 + $0x68] sm:$0xff]
    %v465 = vld [vmem:[#allocation13 + $0x70] sm:$0xff]
    %v466 = vld [vmem:[#allocation13 + $0x78] sm:$0xff]
    %v467 = vld [vmem:[%s7] sm:$0x1]
    %v468 = vld [vmem:[#allocation3] sm:$0xff]
    %v469 = vld [vmem:[#allocation3 + $0x8] sm:$0xff]
    %v470 = vld [vmem:[#allocation3 + $0x10] sm:$0xff]
    %v471 = vld [vmem:[#allocation3 + $0x18] sm:$0xff]
    %v472 = vld [vmem:[#allocation3 + $0x20] sm:$0xff]
    %v473 = vld [vmem:[#allocation3 + $0x28] sm:$0xff]
    %v474 = vld [vmem:[#allocation3 + $0x30] sm:$0xff]
    %v475 = vld [vmem:[#allocation3 + $0x38] sm:$0xff]
    %v477 = vperm.slane %v467, 0
    %479 = vmatpush.msra.mxu0 %v450
    %480 = vmatpush.msra.mxu0 %v449
    %481 = vmatpush.msra.mxu0 %v448
    %482 = vmatpush.msra.mxu0 %v447
    %483 = vmatpush.msra.mxu0 %v446
    %484 = vmatpush.msra.mxu0 %v445
    %485 = vmatpush.msra.mxu0 %v444
    %486 = vmatpush.msra.mxu0 %v443
    %487 = vmatpush.msra.mxu0 %v442
    %488 = vmatpush.msra.mxu0 %v441
    %489 = vmatpush.msra.mxu0 %v440
    %490 = vmatpush.msra.mxu0 %v439
    %491 = vmatpush.msra.mxu0 %v438
    %492 = vmatpush.msra.mxu0 %v437
    %493 = vmatpush.msra.mxu0 %v436
    %494 = vmatpush.msra.mxu0 %v435
    %495 = vmatmul.f32.gmra.mxu0 %v468
    %v496 = vpop.f32.mrf.mxu0
    %v497 = vadd.f32 %v477, %v496
    %498 = vmatmul.f32.gmra.mxu0 %v469
    %v499 = vpop.f32.mrf.mxu0
    %v500 = vadd.f32 %v477, %v499
    %501 = vmatmul.f32.gmra.mxu0 %v470
    %v502 = vpop.f32.mrf.mxu0
    %v503 = vadd.f32 %v477, %v502
    %504 = vmatmul.f32.gmra.mxu0 %v471
    %v505 = vpop.f32.mrf.mxu0
    %v506 = vadd.f32 %v477, %v505
    %507 = vmatmul.f32.gmra.mxu0 %v472
    %v508 = vpop.f32.mrf.mxu0
    %v509 = vadd.f32 %v477, %v508
    %510 = vmatmul.f32.gmra.mxu0 %v473
    %v511 = vpop.f32.mrf.mxu0
    %v512 = vadd.f32 %v477, %v511
    %513 = vmatmul.f32.gmra.mxu0 %v474
    %v514 = vpop.f32.mrf.mxu0
    %v515 = vadd.f32 %v477, %v514
    %516 = vmatmul.f32.gmra.mxu0 %v475
    %v517 = vpop.f32.mrf.mxu0
    %v518 = vadd.f32 %v477, %v517
    %519 = vdwg.mxu0
    %520 = vst [vmem:[#allocation2] sm:$0xff] %v497
    %521 = vst [vmem:[#allocation2 + $0x8] sm:$0xff] %v500
    %522 = vst [vmem:[#allocation2 + $0x10] sm:$0xff] %v503
    %523 = vst [vmem:[#allocation2 + $0x18] sm:$0xff] %v506
    %524 = vst [vmem:[#allocation2 + $0x20] sm:$0xff] %v509
    %525 = vst [vmem:[#allocation2 + $0x28] sm:$0xff] %v512
    %526 = vst [vmem:[#allocation2 + $0x30] sm:$0xff] %v515
    %527 = vst [vmem:[#allocation2 + $0x38] sm:$0xff] %v518
    %s528 = scalar_lea.vmem [#allocation7], 8
    %v529 = vld [vmem:[%s528] sm:$0xff]
    %v530 = vld [vmem:[#allocation2] sm:$0xff]
    %531 = vmatpush.msra.mxu0 %v466
    %532 = vmatpush.msra.mxu0 %v465
    %533 = vmatpush.msra.mxu0 %v464
    %534 = vmatpush.msra.mxu0 %v463
    %535 = vmatpush.msra.mxu0 %v462
    %536 = vmatpush.msra.mxu0 %v461
    %537 = vmatpush.msra.mxu0 %v460
    %538 = vmatpush.msra.mxu0 %v459
    %539 = vmatpush.msra.mxu0 %v458
    %540 = vmatpush.msra.mxu0 %v457
    %541 = vmatpush.msra.mxu0 %v456
    %542 = vmatpush.msra.mxu0 %v455
    %543 = vmatpush.msra.mxu0 %v454
    %544 = vmatpush.msra.mxu0 %v453
    %545 = vmatpush.msra.mxu0 %v452
    %546 = vmatpush.msra.mxu0 %v451
    %547 = vmatmul.f32.gmra.mxu0 %v529
    %v548 = vpop.f32.mrf.mxu0
    %v549 = vadd.f32 0.0, %v548
    %550 = vdwg.mxu0
    %v551 = vadd.f32 %v530, %v549
    %v552 = vtanh.pop %v551
    %553 = vst [vmem:[#allocation3] sm:$0xff] %v552
    %v554 = vld [vmem:[#allocation2 + $0x8] sm:$0xff]
    %555 = vmatpush.msra.mxu0 %v466
    %556 = vmatpush.msra.mxu0 %v465
    %557 = vmatpush.msra.mxu0 %v464
    %558 = vmatpush.msra.mxu0 %v463
    %559 = vmatpush.msra.mxu0 %v462
    %560 = vmatpush.msra.mxu0 %v461
    %561 = vmatpush.msra.mxu0 %v460
    %562 = vmatpush.msra.mxu0 %v459
    %563 = vmatpush.msra.mxu0 %v458
    %564 = vmatpush.msra.mxu0 %v457
    %565 = vmatpush.msra.mxu0 %v456
    %566 = vmatpush.msra.mxu0 %v455
    %567 = vmatpush.msra.mxu0 %v454
    %568 = vmatpush.msra.mxu0 %v453
    %569 = vmatpush.msra.mxu0 %v452
    %570 = vmatpush.msra.mxu0 %v451
    %571 = vmatmul.f32.gmra.mxu0 %v552
    %v572 = vpop.f32.mrf.mxu0
    %v573 = vadd.f32 0.0, %v572
    %574 = vdwg.mxu0
    %v575 = vadd.f32 %v554, %v573
    %v576 = vtanh.pop %v575
    %577 = vst [vmem:[#allocation3 + $0x8] sm:$0xff] %v576
    %v578 = vld [vmem:[#allocation2 + $0x10] sm:$0xff]
    %579 = vmatpush.msra.mxu0 %v466
    %580 = vmatpush.msra.mxu0 %v465
    %581 = vmatpush.msra.mxu0 %v464
    %582 = vmatpush.msra.mxu0 %v463
    %583 = vmatpush.msra.mxu0 %v462
    %584 = vmatpush.msra.mxu0 %v461
    %585 = vmatpush.msra.mxu0 %v460
    %586 = vmatpush.msra.mxu0 %v459
    %587 = vmatpush.msra.mxu0 %v458
    %588 = vmatpush.msra.mxu0 %v457
    %589 = vmatpush.msra.mxu0 %v456
    %590 = vmatpush.msra.mxu0 %v455
    %591 = vmatpush.msra.mxu0 %v454
    %592 = vmatpush.msra.mxu0 %v453
    %593 = vmatpush.msra.mxu0 %v452
    %594 = vmatpush.msra.mxu0 %v451
    %595 = vmatmul.f32.gmra.mxu0 %v576
    %v596 = vpop.f32.mrf.mxu0
    %v597 = vadd.f32 0.0, %v596
    %598 = vdwg.mxu0
    %v599 = vadd.f32 %v578, %v597
    %v600 = vtanh.pop %v599
    %601 = vst [vmem:[#allocation3 + $0x10] sm:$0xff] %v600
    %v602 = vld [vmem:[#allocation2 + $0x18] sm:$0xff]
    %603 = vmatpush.msra.mxu0 %v466
    %604 = vmatpush.msra.mxu0 %v465
    %605 = vmatpush.msra.mxu0 %v464
    %606 = vmatpush.msra.mxu0 %v463
    %607 = vmatpush.msra.mxu0 %v462
    %608 = vmatpush.msra.mxu0 %v461
    %609 = vmatpush.msra.mxu0 %v460
    %610 = vmatpush.msra.mxu0 %v459
    %611 = vmatpush.msra.mxu0 %v458
    %612 = vmatpush.msra.mxu0 %v457
    %613 = vmatpush.msra.mxu0 %v456
    %614 = vmatpush.msra.mxu0 %v455
    %615 = vmatpush.msra.mxu0 %v454
    %616 = vmatpush.msra.mxu0 %v453
    %617 = vmatpush.msra.mxu0 %v452
    %618 = vmatpush.msra.mxu0 %v451
    %619 = vmatmul.f32.gmra.mxu0 %v600
    %v620 = vpop.f32.mrf.mxu0
    %v621 = vadd.f32 0.0, %v620
    %622 = vdwg.mxu0
    %v623 = vadd.f32 %v602, %v621
    %v624 = vtanh.pop %v623
    %625 = vst [vmem:[#allocation3 + $0x18] sm:$0xff] %v624
    %v626 = vld [vmem:[#allocation2 + $0x20] sm:$0xff]
    %627 = vmatpush.msra.mxu0 %v466
    %628 = vmatpush.msra.mxu0 %v465
    %629 = vmatpush.msra.mxu0 %v464
    %630 = vmatpush.msra.mxu0 %v463
    %631 = vmatpush.msra.mxu0 %v462
    %632 = vmatpush.msra.mxu0 %v461
    %633 = vmatpush.msra.mxu0 %v460
    %634 = vmatpush.msra.mxu0 %v459
    %635 = vmatpush.msra.mxu0 %v458
    %636 = vmatpush.msra.mxu0 %v457
    %637 = vmatpush.msra.mxu0 %v456
    %638 = vmatpush.msra.mxu0 %v455
    %639 = vmatpush.msra.mxu0 %v454
    %640 = vmatpush.msra.mxu0 %v453
    %641 = vmatpush.msra.mxu0 %v452
    %642 = vmatpush.msra.mxu0 %v451
    %643 = vmatmul.f32.gmra.mxu0 %v624
    %v644 = vpop.f32.mrf.mxu0
    %v645 = vadd.f32 0.0, %v644
    %646 = vdwg.mxu0
    %v647 = vadd.f32 %v626, %v645
    %v648 = vtanh.pop %v647
    %649 = vst [vmem:[#allocation3 + $0x20] sm:$0xff] %v648
    %v650 = vld [vmem:[#allocation2 + $0x28] sm:$0xff]
    %651 = vmatpush.msra.mxu0 %v466
    %652 = vmatpush.msra.mxu0 %v465
    %653 = vmatpush.msra.mxu0 %v464
    %654 = vmatpush.msra.mxu0 %v463
    %655 = vmatpush.msra.mxu0 %v462
    %656 = vmatpush.msra.mxu0 %v461
    %657 = vmatpush.msra.mxu0 %v460
    %658 = vmatpush.msra.mxu0 %v459
    %659 = vmatpush.msra.mxu0 %v458
    %660 = vmatpush.msra.mxu0 %v457
    %661 = vmatpush.msra.mxu0 %v456
    %662 = vmatpush.msra.mxu0 %v455
    %663 = vmatpush.msra.mxu0 %v454
    %664 = vmatpush.msra.mxu0 %v453
    %665 = vmatpush.msra.mxu0 %v452
    %666 = vmatpush.msra.mxu0 %v451
    %667 = vmatmul.f32.gmra.mxu0 %v648
    %v668 = vpop.f32.mrf.mxu0
    %v669 = vadd.f32 0.0, %v668
    %670 = vdwg.mxu0
    %v671 = vadd.f32 %v650, %v669
    %v672 = vtanh.pop %v671
    %673 = vst [vmem:[#allocation3 + $0x28] sm:$0xff] %v672
    %v674 = vld [vmem:[#allocation2 + $0x30] sm:$0xff]
    %675 = vmatpush.msra.mxu0 %v466
    %676 = vmatpush.msra.mxu0 %v465
    %677 = vmatpush.msra.mxu0 %v464
    %678 = vmatpush.msra.mxu0 %v463
    %679 = vmatpush.msra.mxu0 %v462
    %680 = vmatpush.msra.mxu0 %v461
    %681 = vmatpush.msra.mxu0 %v460
    %682 = vmatpush.msra.mxu0 %v459
    %683 = vmatpush.msra.mxu0 %v458
    %684 = vmatpush.msra.mxu0 %v457
    %685 = vmatpush.msra.mxu0 %v456
    %686 = vmatpush.msra.mxu0 %v455
    %687 = vmatpush.msra.mxu0 %v454
    %688 = vmatpush.msra.mxu0 %v453
    %689 = vmatpush.msra.mxu0 %v452
    %690 = vmatpush.msra.mxu0 %v451
    %691 = vmatmul.f32.gmra.mxu0 %v672
    %v692 = vpop.f32.mrf.mxu0
    %v693 = vadd.f32 0.0, %v692
    %694 = vdwg.mxu0
    %v695 = vadd.f32 %v674, %v693
    %v696 = vtanh.pop %v695
    %697 = vst [vmem:[#allocation3 + $0x30] sm:$0xff] %v696
    %v698 = vld [vmem:[#allocation2 + $0x38] sm:$0xff]
    %699 = vmatpush.msra.mxu0 %v466
    %700 = vmatpush.msra.mxu0 %v465
    %701 = vmatpush.msra.mxu0 %v464
    %702 = vmatpush.msra.mxu0 %v463
    %703 = vmatpush.msra.mxu0 %v462
    %704 = vmatpush.msra.mxu0 %v461
    %705 = vmatpush.msra.mxu0 %v460
    %706 = vmatpush.msra.mxu0 %v459
    %707 = vmatpush.msra.mxu0 %v458
    %708 = vmatpush.msra.mxu0 %v457
    %709 = vmatpush.msra.mxu0 %v456
    %710 = vmatpush.msra.mxu0 %v455
    %711 = vmatpush.msra.mxu0 %v454
    %712 = vmatpush.msra.mxu0 %v453
    %713 = vmatpush.msra.mxu0 %v452
    %714 = vmatpush.msra.mxu0 %v451
    %715 = vmatmul.f32.gmra.mxu0 %v696
    %v716 = vpop.f32.mrf.mxu0
    %v717 = vadd.f32 0.0, %v716
    %718 = vdwg.mxu0
    %v719 = vadd.f32 %v698, %v717
    %v720 = vtanh.pop %v719
    %721 = vst [vmem:[#allocation3 + $0x38] sm:$0xff] %v720
    %s722 = scalar_lea.vmem [#allocation17], 8
    %723 = vst [vmem:[%s722] sm:$0xff] %v720
    %v724 = vld [vmem:[#allocation3] sm:$0xff]
    %v725 = vld [vmem:[#allocation3 + $0x8] sm:$0xff]
    %v726 = vld [vmem:[#allocation3 + $0x10] sm:$0xff]
    %v727 = vld [vmem:[#allocation3 + $0x18] sm:$0xff]
    %v728 = vld [vmem:[#allocation3 + $0x20] sm:$0xff]
    %v729 = vld [vmem:[#allocation3 + $0x28] sm:$0xff]
    %v730 = vld [vmem:[#allocation3 + $0x30] sm:$0xff]
    %v731 = vld [vmem:[#allocation3 + $0x38] sm:$0xff]
    %v732 = vld [vmem:[#allocation15] sm:$0xff]
    %v733 = vld [vmem:[#allocation15 + $0x8] sm:$0xff]
    %v734 = vld [vmem:[#allocation15 + $0x10] sm:$0xff]
    %v735 = vld [vmem:[#allocation15 + $0x18] sm:$0xff]
    %v736 = vld [vmem:[#allocation15 + $0x20] sm:$0xff]
    %v737 = vld [vmem:[#allocation15 + $0x28] sm:$0xff]
    %v738 = vld [vmem:[#allocation15 + $0x30] sm:$0xff]
    %v739 = vld [vmem:[#allocation15 + $0x38] sm:$0xff]
    %v740 = vld [vmem:[#allocation15 + $0x40] sm:$0xff]
    %v741 = vld [vmem:[#allocation15 + $0x48] sm:$0xff]
    %v742 = vld [vmem:[#allocation15 + $0x50] sm:$0xff]
    %v743 = vld [vmem:[#allocation15 + $0x58] sm:$0xff]
    %v744 = vld [vmem:[#allocation15 + $0x60] sm:$0xff]
    %v745 = vld [vmem:[#allocation15 + $0x68] sm:$0xff]
    %v746 = vld [vmem:[#allocation15 + $0x70] sm:$0xff]
    %v747 = vld [vmem:[#allocation15 + $0x78] sm:$0xff]
    %v748 = vld [vmem:[%s9] sm:$0x1]
    %v750 = vperm.slane %v748, 0
    %752 = vmatpush.msra.mxu0 %v747
    %753 = vmatpush.msra.mxu0 %v746
    %754 = vmatpush.msra.mxu0 %v745
    %755 = vmatpush.msra.mxu0 %v744
    %756 = vmatpush.msra.mxu0 %v743
    %757 = vmatpush.msra.mxu0 %v742
    %758 = vmatpush.msra.mxu0 %v741
    %759 = vmatpush.msra.mxu0 %v740
    %760 = vmatpush.msra.mxu0 %v739
    %761 = vmatpush.msra.mxu0 %v738
    %762 = vmatpush.msra.mxu0 %v737
    %763 = vmatpush.msra.mxu0 %v736
    %764 = vmatpush.msra.mxu0 %v735
    %765 = vmatpush.msra.mxu0 %v734
    %766 = vmatpush.msra.mxu0 %v733
    %767 = vmatpush.msra.mxu0 %v732
    %768 = vmatmul.f32.gmra.mxu0 %v724
    %v769 = vpop.f32.mrf.mxu0
    %v770 = vadd.f32 %v750, %v769
    %771 = vmatmul.f32.gmra.mxu0 %v725
    %v772 = vpop.f32.mrf.mxu0
    %v773 = vadd.f32 %v750, %v772
    %774 = vmatmul.f32.gmra.mxu0 %v726
    %v775 = vpop.f32.mrf.mxu0
    %v776 = vadd.f32 %v750, %v775
    %777 = vmatmul.f32.gmra.mxu0 %v727
    %v778 = vpop.f32.mrf.mxu0
    %v779 = vadd.f32 %v750, %v778
    %780 = vmatmul.f32.gmra.mxu0 %v728
    %v781 = vpop.f32.mrf.mxu0
    %v782 = vadd.f32 %v750, %v781
    %783 = vmatmul.f32.gmra.mxu0 %v729
    %v784 = vpop.f32.mrf.mxu0
    %v785 = vadd.f32 %v750, %v784
    %786 = vmatmul.f32.gmra.mxu0 %v730
    %v787 = vpop.f32.mrf.mxu0
    %v788 = vadd.f32 %v750, %v787
    %789 = vmatmul.f32.gmra.mxu0 %v731
    %v790 = vpop.f32.mrf.mxu0
    %v791 = vadd.f32 %v750, %v790
    %792 = vdwg.mxu0
    %793 = vst [vmem:[#allocation16] sm:$0xff] %v770
    %794 = vst [vmem:[#allocation16 + $0x8] sm:$0xff] %v773
    %795 = vst [vmem:[#allocation16 + $0x10] sm:$0xff] %v776
    %796 = vst [vmem:[#allocation16 + $0x18] sm:$0xff] %v779
    %797 = vst [vmem:[#allocation16 + $0x20] sm:$0xff] %v782
    %798 = vst [vmem:[#allocation16 + $0x28] sm:$0xff] %v785
    %799 = vst [vmem:[#allocation16 + $0x30] sm:$0xff] %v788
    %800 = vst [vmem:[#allocation16 + $0x38] sm:$0xff] %v791
    // Predicated region
    $region70: #{tpu_custom_call.1} parent=1 // pred_check
      _
    $region71: #{tpu_custom_call.1} parent=1 // pred_check_branch
      %802 = sbr.rel (0) target = $region73
    $region72: #{tpu_custom_call.1} parent=1 // pred_region
      %804 = vsyncadd [#allocation6], 0
      %s805 = sshll.u32 [#allocation16], 4
      %s806 = int_to_ptr.vmem [resolvable:$true] %s805
      %s807 = sshll.u32 %s10, 4
      %s808 = int_to_ptr.hbm [resolvable:$true] %s807
      %813 = dma.vmem_to_hbm [thread:$0]  %s806, 1024, %s808, [#allocation6], 128, 128, 8
    $region73: #{tpu_custom_call.1} parent=1 // pred_fallthru
      _
    // Predicated region
    $region74: #{tpu_custom_call.1} parent=1 // pred_check
      _
    $region75: #{tpu_custom_call.1} parent=1 // pred_check_branch
      %815 = sbr.rel (0) target = $region77
    $region76: #{tpu_custom_call.1} parent=1 // pred_region
      %817 = vsyncadd [#allocation18], 0
      %s818 = sshll.u32 [#allocation17], 4
      %s819 = int_to_ptr.vmem [resolvable:$true] %s818
      %s820 = sshll.u32 %s11, 4
      %s821 = int_to_ptr.hbm [resolvable:$true] %s820
      %826 = dma.vmem_to_hbm [thread:$0]  %s819, 256, %s821, [#allocation18], 128, 128, 8
    $region77: #{tpu_custom_call.1} parent=1 // pred_fallthru
      _
    // Predicated region
    $region78: #{tpu_custom_call.1} parent=1 // pred_check
      _
    $region79: #{tpu_custom_call.1} parent=1 // pred_check_branch
      %828 = sbr.rel (0) target = $region81
    $region80: #{tpu_custom_call.1} parent=1 // pred_region
      %830 = dma.done [#allocation6], 1024
    $region81: #{tpu_custom_call.1} parent=1 // pred_fallthru
      _
    // Predicated region
    $region82: #{tpu_custom_call.1} parent=1 // pred_check
      _
    $region83: #{tpu_custom_call.1} parent=1 // pred_check_branch
      %832 = sbr.rel (0) target = $region85
    $region84: #{tpu_custom_call.1} parent=1 // pred_region
      %834 = dma.done [#allocation18], 256
    $region85: #{tpu_custom_call.1} parent=1 // pred_fallthru
      _
    %835 = vsyncpa [#allocation5], 1
    %836 = vsyncpa [#allocation8], 1
    %837 = vsyncpa [#allocation11], 1
    %838 = vsyncpa [#allocation14], 1
    %839 = vsyncpa [#allocation6], 1
    %840 = vsyncpa [#allocation18], 1

</llo_original>
